<compile_context>
chip_gen: v7x
topology: tpu7x:2x2x1
jax: 0.10.0
libtpu: 0.0.40
codegen_flags: <defaults>
</compile_context>

<pallas_src>
import math
import functools

import numpy as np
import jax
import jax.numpy as jnp
from jax.experimental import pallas as pl
from jax.experimental.pallas import tpu as pltpu


# --------------------------------------------------------------------------------------
# VMEM budget / tile-size helpers
# --------------------------------------------------------------------------------------
def _vmem_budget_bytes():
    """Per-core VMEM budget used to size tiles (leaves headroom for compiler scratch)."""
    cap = None
    try:
        cap = getattr(pltpu.get_tpu_info(), "vmem_capacity_bytes", None)
    except Exception:
        cap = None
    if not cap:
        cap = 64 * 1024 * 1024                       # conservative default (v7x per-TC)
    if cap <= 64 * 1024 * 1024:                      # v7x-class: stay well under 64 MiB
        return min(int(cap * 0.8), 52 * 1024 * 1024)
    return min(int(cap * 0.7), 96 * 1024 * 1024)     # v5e / v6e (128 MiB physical)


def _tile_candidates(total, sub, cap=1024):
    """Divisors of `total` that are multiples of `sub` (largest first), else [total]."""
    cands = [d for d in range(sub, min(total, cap) + 1, sub) if total % d == 0]
    cands.sort(reverse=True)
    if not cands:
        cands = [total]        # full dimension is always a legal block size
    return cands


def _attention_tiles(S, D, H, dk, dv, x_dtype, compute_dtype, out_dtype,
                     with_score, score_dtype, budget_bytes):
    """Pick (tq, tk) for the attention kernel from the per-generation VMEM budget."""
    xi = np.dtype(x_dtype).itemsize
    ci = np.dtype(compute_dtype).itemsize
    oi = np.dtype(out_dtype).itemsize
    si = np.dtype(score_dtype).itemsize
    sub = 16 if ci < 4 else 8

    def estimate(tq, tk):
        e = 2 * H * tq * dk * ci              # Q block (double-buffered)
        e += 2 * H * tk * (dk + dv) * ci      # K + V blocks
        e += 2 * tq * D * xi                  # residual x block
        e += 2 * H * dv * D * ci              # W_out (grid-invariant, still dbl-buffered)
        e += 2 * 2 * D * 4                    # gamma, beta
        e += 2 * tq * D * oi                  # out block
        if with_score:
            e += 2 * H * tq * S * si          # score block
        e += H * tq * (8 + 4 * dv)            # m, l, acc scratch (f32)
        e += tq * H * dv * ci                 # lane-dense packed-context scratch
        e += 3 * H * tq * tk * 4              # live f32 score/prob intermediates
        e += 4 * tq * D * 4                   # projection / layernorm f32 temporaries
        return e

    q_cands = _tile_candidates(S, sub, cap=1024)
    k_cands = [S] if with_score else q_cands   # score path needs the full row at once

    pairs = sorted(((a, b) for a in q_cands for b in k_cands),
                   key=lambda p: (min(p), p[0] * p[1]), reverse=True)
    for a, b in pairs:
        e = estimate(a, b)
        if e <= budget_bytes:
            return a, b, e
    a, b = q_cands[-1], k_cands[-1]
    return a, b, estimate(a, b)


# --------------------------------------------------------------------------------------
# Stage 1: head-major Q/K/V projection kernel
# --------------------------------------------------------------------------------------
def _qkv_proj_kernel(x_ref, wq_ref, wk_ref, wv_ref, q_ref, k_ref, v_ref, *, compute_dtype):
    xc = x_ref[0].astype(compute_dtype)                                   # (ts, D)
    q_ref[0, 0] = jnp.dot(xc, wq_ref[0],
                          preferred_element_type=jnp.float32).astype(q_ref.dtype)
    k_ref[0, 0] = jnp.dot(xc, wk_ref[0],
                          preferred_element_type=jnp.float32).astype(k_ref.dtype)
    v_ref[0, 0] = jnp.dot(xc, wv_ref[0],
                          preferred_element_type=jnp.float32).astype(v_ref.dtype)


def _project_qkv(x, wq_h, wk_h, wv_h, *, compute_dtype, budget_bytes):
    """Head-major Q/K/V projections -> (B, H, S, d_k/d_v) arrays in compute_dtype.

    Grid is (batch, seq_tile, head); the head axis is innermost so the x tile stays
    resident in VMEM across all heads (its block index does not change)."""
    B, S, D = x.shape
    H, _, dk = wq_h.shape
    dv = wv_h.shape[2]
    ci = np.dtype(compute_dtype).itemsize
    xi = np.dtype(x.dtype).itemsize
    sub = 16 if ci < 4 else 8

    def estimate(ts):
        e = 2 * ts * D * xi                               # x block (double-buffered)
        e += 2 * D * (2 * dk + dv) * ci                   # per-head weight blocks
        e += 2 * ts * (2 * dk + dv) * ci                  # q/k/v output blocks
        e += ts * D * ci + 3 * ts * max(dk, dv) * 4 + 2 * ts * D * 4
        return e

    ts_cands = _tile_candidates(S, sub, cap=512)
    ts = None
    for cand in ts_cands:
        if estimate(cand) <= budget_bytes:
            ts = cand
            break
    if ts is None:
        ts = ts_cands[-1]
    n_s = S // ts

    kernel = functools.partial(_qkv_proj_kernel, compute_dtype=compute_dtype)
    vmem_limit = int(min(budget_bytes, max(16 * 1024 * 1024, int(estimate(ts) * 1.5))))

    return pl.pallas_call(
        kernel,
        out_shape=(jax.ShapeDtypeStruct((B, H, S, dk), compute_dtype),
                   jax.ShapeDtypeStruct((B, H, S, dk), compute_dtype),
                   jax.ShapeDtypeStruct((B, H, S, dv), compute_dtype)),
        grid_spec=pltpu.PrefetchScalarGridSpec(
            num_scalar_prefetch=0,
            grid=(B, n_s, H),
            in_specs=[
                pl.BlockSpec((1, ts, D), lambda b, s, h: (b, s, 0)),   # x tile
                pl.BlockSpec((1, D, dk), lambda b, s, h: (h, 0, 0)),   # WQ (head h, scaled)
                pl.BlockSpec((1, D, dk), lambda b, s, h: (h, 0, 0)),   # WK (head h)
                pl.BlockSpec((1, D, dv), lambda b, s, h: (h, 0, 0)),   # WV (head h)
            ],
            out_specs=[
                pl.BlockSpec((1, 1, ts, dk), lambda b, s, h: (b, h, s, 0)),
                pl.BlockSpec((1, 1, ts, dk), lambda b, s, h: (b, h, s, 0)),
                pl.BlockSpec((1, 1, ts, dv), lambda b, s, h: (b, h, s, 0)),
            ],
        ),
        compiler_params=pltpu.CompilerParams(
            dimension_semantics=("parallel", "parallel", "arbitrary"),
            vmem_limit_bytes=vmem_limit,
        ),
    )(x, wq_h, wk_h, wv_h)


# --------------------------------------------------------------------------------------
# Stage 2: flash-style attention + output projection + residual + LayerNorm
# --------------------------------------------------------------------------------------
def _mha_attention_kernel(q_ref, k_ref, v_ref, x_ref, wo_ref, gamma_ref, beta_ref,
                          *rest, eps, compute_dtype, with_score):
    if with_score:
        score_ref, out_ref, m_scr, l_scr, acc_scr, ctx_scr = rest
    else:
        out_ref, m_scr, l_scr, acc_scr, ctx_scr = rest

    cd = compute_dtype
    ki = pl.program_id(2)

    @pl.when(ki == 0)
    def _():
        m_scr[...] = jnp.full(m_scr.shape, -jnp.inf, m_scr.dtype)
        l_scr[...] = jnp.zeros(l_scr.shape, l_scr.dtype)
        acc_scr[...] = jnp.zeros(acc_scr.shape, acc_scr.dtype)

    q = q_ref[0]                    # (H, tq, d_k), compute dtype, 1/sqrt(d_k) folded in
    k = k_ref[0]                    # (H, tk, d_k)
    v = v_ref[0]                    # (H, tk, d_v)

    # Head-batched QK^T on the MXU with f32 accumulation: (H, tq, tk).
    s = jnp.einsum("hqd,hkd->hqk", q, k, preferred_element_type=jnp.float32)
    # TODO(synk): optional attention mask (masked_fill with -1e9) not wired in; the
    #             reference forward is exercised with mask=None.

    m_prev = m_scr[...]
    m_new = jnp.maximum(m_prev, jnp.max(s, axis=-1, keepdims=True))
    alpha = jnp.exp(m_prev - m_new)
    p = jnp.exp(s - m_new)
    l_new = alpha * l_scr[...] + jnp.sum(p, axis=-1, keepdims=True)

    if with_score:
        # return_score forces a single KV block (tk == S), so l_new is already the final
        # denominator; exact reciprocal keeps returned probabilities summing to 1
        # (parity with torch.softmax).  Stored in score_dtype (bf16 by default).
        score_ref[0] = (p * pl.reciprocal(l_new, approx=False)).astype(score_ref.dtype)

    acc_new = alpha * acc_scr[...] + jnp.einsum(
        "hqk,hkd->hqd", p.astype(cd), v, preferred_element_type=jnp.float32)
    m_scr[...] = m_new
    l_scr[...] = l_new
    acc_scr[...] = acc_new

    @pl.when(ki == pl.num_programs(2) - 1)
    def _():
        # Normalize (EUP approx reciprocal - free issue slot), repack heads into a
        # lane-dense (tq, H*d_v) slab, then fuse output projection + residual + LN.
        ctx = acc_new * pl.reciprocal(l_new, approx=True)            # (H, tq, d_v) f32
        n_heads, _, dv = ctx.shape
        for h in range(n_heads):
            ctx_scr[:, h * dv:(h + 1) * dv] = ctx[h].astype(ctx_scr.dtype)
        proj = jnp.dot(ctx_scr[...], wo_ref[...],
                       preferred_element_type=jnp.float32)            # (tq, d_model)
        # TODO(synk): nn.Dropout treated as identity (inference / eval mode).
        y = proj + x_ref[0].astype(jnp.float32)                       # residual add
        mean = jnp.mean(y, axis=-1, keepdims=True)
        yc = y - mean
        var = jnp.mean(yc * yc, axis=-1, keepdims=True)
        y = yc * jax.lax.rsqrt(var + eps)
        y = y * gamma_ref[...] + beta_ref[...]
        out_ref[0] = y.astype(out_ref.dtype)


def multi_head_attention(x, wq, wk, wv, wo, gamma, beta, *,
                         num_heads, d_k, d_v, eps=1e-6,
                         compute_dtype=jnp.bfloat16,
                         return_score=False, score_dtype=jnp.bfloat16):
    """Fused MultiHeadAttention forward (projections + SDPA + output projection +
    residual + LayerNorm), matching the PyTorch module in eval mode.

    x: (B, S, d_model).  Projection weights are (in_features, out_features) matrices
    (the transpose of nn.Linear.weight), so the kernels compute x @ W.
    Returns (score, out) when return_score=True, else just out (the default/perf path).
    """
    B, S, D = x.shape
    H = num_heads
    assert wq.shape == (D, H * d_k) and wk.shape == (D, H * d_k)
    assert wv.shape == (D, H * d_v) and wo.shape == (H * d_v, D)
    assert gamma.shape[-1] == D and beta.shape[-1] == D

    cd = compute_dtype
    out_dtype = x.dtype
    budget = _vmem_budget_bytes()

    # Pre-cast weights to the MXU compute dtype once (halves weight DMA, removes all
    # per-tile weight casts) and reshape QKV weights head-major; 1/sqrt(d_k) is folded
    # into WQ so no per-tile score scaling is needed.
    scale = 1.0 / math.sqrt(d_k)
    wq_h = (wq.astype(jnp.float32) * scale).reshape(D, H, d_k).transpose(1, 0, 2).astype(cd)
    wk_h = wk.reshape(D, H, d_k).transpose(1, 0, 2).astype(cd)
    wv_h = wv.reshape(D, H, d_v).transpose(1, 0, 2).astype(cd)
    wo_c = wo.astype(cd)
    gamma2 = gamma.reshape(1, D).astype(jnp.float32)
    beta2 = beta.reshape(1, D).astype(jnp.float32)

    # Stage 1: head-major Q/K/V projections.
    q_hm, k_hm, v_hm = _project_qkv(x, wq_h, wk_h, wv_h,
                                    compute_dtype=cd, budget_bytes=budget)

    # Stage 2: attention kernel tiling derived from the VMEM budget.
    tq, tk, est = _attention_tiles(S, D, H, d_k, d_v, x.dtype, cd, out_dtype,
                                   return_score, score_dtype, budget)
    n_q, n_k = S // tq, S // tk
    vmem_limit = int(min(budget, max(32 * 1024 * 1024, int(est * 1.4))))

    kernel = functools.partial(_mha_attention_kernel, eps=eps, compute_dtype=cd,
                               with_score=return_score)

    in_specs = [
        pl.BlockSpec((1, H, tq, d_k), lambda b, q, k: (b, 0, q, 0)),   # Q (pre-scaled)
        pl.BlockSpec((1, H, tk, d_k), lambda b, q, k: (b, 0, k, 0)),   # K tile
        pl.BlockSpec((1, H, tk, d_v), lambda b, q, k: (b, 0, k, 0)),   # V tile
        pl.BlockSpec((1, tq, D), lambda b, q, k: (b, q, 0)),           # x (residual / LN)
        # Grid-invariant operands (constant index maps => copied once).  Single
        # buffering them (pipeline_mode=pl.Buffered(1)) would free the dead second
        # copy; left default here for portability.
        pl.BlockSpec((H * d_v, D), lambda b, q, k: (0, 0)),            # W_out (pre-cast)
        pl.BlockSpec((1, D), lambda b, q, k: (0, 0)),                  # LayerNorm gamma
        pl.BlockSpec((1, D), lambda b, q, k: (0, 0)),                  # LayerNorm beta
    ]
    scratch_shapes = [
        pltpu.VMEM((H, tq, 1), jnp.float32),      # running max
        pltpu.VMEM((H, tq, 1), jnp.float32),      # running softmax denominator
        pltpu.VMEM((H, tq, d_v), jnp.float32),    # unnormalized context accumulator
        pltpu.VMEM((tq, H * d_v), cd),            # lane-dense packed context
    ]
    if return_score:
        out_shape = (jax.ShapeDtypeStruct((B, H, S, S), score_dtype),
                     jax.ShapeDtypeStruct((B, S, D), out_dtype))
        out_specs = [pl.BlockSpec((1, H, tq, S), lambda b, q, k: (b, 0, q, 0)),
                     pl.BlockSpec((1, tq, D), lambda b, q, k: (b, q, 0))]
    else:
        out_shape = jax.ShapeDtypeStruct((B, S, D), out_dtype)
        out_specs = pl.BlockSpec((1, tq, D), lambda b, q, k: (b, q, 0))

    return pl.pallas_call(
        kernel,
        out_shape=out_shape,
        grid_spec=pltpu.PrefetchScalarGridSpec(
            num_scalar_prefetch=0,
            grid=(B, n_q, n_k),
            in_specs=in_specs,
            out_specs=out_specs,
            scratch_shapes=scratch_shapes,
        ),
        compiler_params=pltpu.CompilerParams(
            # Batch and query-tile axes are independent (megacore / v7x dual-TC);
            # only the KV axis carries the online-softmax accumulators.
            dimension_semantics=("parallel", "parallel", "arbitrary"),
            vmem_limit_bytes=vmem_limit,
        ),
    )(q_hm, k_hm, v_hm, x, wo_c, gamma2, beta2)


# --------------------------------------------------------------------------------------
# Plain-JAX reference mirroring the PyTorch forward (eval mode) and the kernel's
# operand-cast pattern (compute_dtype operands, f32 accumulation, scale folded into WQ).
# --------------------------------------------------------------------------------------
def _reference(x, wq, wk, wv, wo, gamma, beta, *, num_heads, d_k, d_v, eps=1e-6,
               compute_dtype=jnp.float32):
    B, S, D = x.shape
    H, dk, dv = num_heads, d_k, d_v
    cd = compute_dtype
    scale = 1.0 / math.sqrt(dk)
    xc = x.astype(cd)
    wq_s = (wq.astype(jnp.float32) * scale).astype(cd)
    q = jnp.einsum("bsd,de->bse", xc, wq_s, preferred_element_type=jnp.float32)
    k = jnp.einsum("bsd,de->bse", xc, wk.astype(cd), preferred_element_type=jnp.float32)
    v = jnp.einsum("bsd,de->bse", xc, wv.astype(cd), preferred_element_type=jnp.float32)
    qh = q.reshape(B, S, H, dk).transpose(0, 2, 1, 3).astype(cd)
    kh = k.reshape(B, S, H, dk).transpose(0, 2, 1, 3).astype(cd)
    vh = v.reshape(B, S, H, dv).transpose(0, 2, 1, 3).astype(cd)
    s = jnp.einsum("bhqd,bhkd->bhqk", qh, kh, preferred_element_type=jnp.float32)
    p = jax.nn.softmax(s, axis=-1)
    ctx = jnp.einsum("bhqk,bhkd->bhqd", p.astype(cd), vh, preferred_element_type=jnp.float32)
    ctx = ctx.transpose(0, 2, 1, 3).reshape(B, S, H * dv)
    out = jnp.einsum("bse,ed->bsd", ctx.astype(cd), wo.astype(cd),
                     preferred_element_type=jnp.float32)
    y = out + x.astype(jnp.float32)
    mean = jnp.mean(y, axis=-1, keepdims=True)
    var = jnp.mean((y - mean) ** 2, axis=-1, keepdims=True)
    y = (y - mean) / jnp.sqrt(var + eps) * gamma + beta
    return p, y


if __name__ == "__main__":
    # Small deterministic config: B=2, S=8, d_model=32, heads=4, d_k=d_v=8
    B, S, D = 2, 8, 32
    H, DK, DV = 4, 8, 8

    key = jax.random.PRNGKey(0)
    kx, kq, kk, kv, ko = jax.random.split(key, 5)

    x = jax.random.normal(kx, (B, S, D), dtype=jnp.float32)
    wq = jax.random.normal(kq, (D, H * DK), dtype=jnp.float32) / math.sqrt(D)
    wk = jax.random.normal(kk, (D, H * DK), dtype=jnp.float32) / math.sqrt(D)
    wv = jax.random.normal(kv, (D, H * DV), dtype=jnp.float32) / math.sqrt(D)
    wo = jax.random.normal(ko, (H * DV, D), dtype=jnp.float32) / math.sqrt(H * DV)
    gamma = jnp.ones((D,), dtype=jnp.float32)   # LayerNorm weight
    beta = jnp.zeros((D,), dtype=jnp.float32)   # LayerNorm bias

    # 1) exact-math path (f32 MXU operands, f32 scores) vs the plain-f32 reference.
    score32, out32 = multi_head_attention(
        x, wq, wk, wv, wo, gamma, beta, num_heads=H, d_k=DK, d_v=DV,
        compute_dtype=jnp.float32, return_score=True, score_dtype=jnp.float32)
    jax.block_until_ready((score32, out32))
    sref32, oref32 = _reference(x, wq, wk, wv, wo, gamma, beta,
                                num_heads=H, d_k=DK, d_v=DV, compute_dtype=jnp.float32)
    assert jnp.allclose(score32, sref32, atol=1e-2, rtol=1e-2), "f32 score mismatch"
    assert jnp.allclose(out32, oref32, atol=1e-2, rtol=1e-2), "f32 output mismatch"

    # 2) bf16 MXU path (bf16 scores by default) vs a reference mirroring the same casts.
    score16, out16 = multi_head_attention(
        x, wq, wk, wv, wo, gamma, beta, num_heads=H, d_k=DK, d_v=DV,
        compute_dtype=jnp.bfloat16, return_score=True)
    jax.block_until_ready((score16, out16))
    sref16, oref16 = _reference(x, wq, wk, wv, wo, gamma, beta,
                                num_heads=H, d_k=DK, d_v=DV, compute_dtype=jnp.bfloat16)
    assert jnp.allclose(score16.astype(jnp.float32), sref16,
                        atol=2e-2, rtol=2e-2), "bf16 score mismatch"
    assert jnp.allclose(out16, oref16, atol=2e-2, rtol=2e-2), "bf16 output mismatch"

    # 3) default perf configuration: no score writeback.
    out_only = multi_head_attention(x, wq, wk, wv, wo, gamma, beta,
                                    num_heads=H, d_k=DK, d_v=DV,
                                    compute_dtype=jnp.bfloat16)
    jax.block_until_ready(out_only)
    assert jnp.allclose(out_only, out16, atol=1e-3, rtol=1e-3), "return_score=False mismatch"

    print("KERNEL_OK")
</pallas_src>

<mosaic_0001>
module attributes {stable_mosaic.version = 11 : i64} {
  func.func @_qkv_proj_kernel(%arg0: i32, %arg1: i32, %arg2: i32, %arg3: memref<1x8x32xf32, #tpu.memory_space<vmem>>, %arg4: memref<1x32x8xf32, #tpu.memory_space<vmem>>, %arg5: memref<1x32x8xf32, #tpu.memory_space<vmem>>, %arg6: memref<1x32x8xf32, #tpu.memory_space<vmem>>, %arg7: memref<1x1x8x8xf32, #tpu.memory_space<vmem>>, %arg8: memref<1x1x8x8xf32, #tpu.memory_space<vmem>>, %arg9: memref<1x1x8x8xf32, #tpu.memory_space<vmem>>) attributes {dimension_semantics = [#tpu.dimension_semantics<parallel>, #tpu.dimension_semantics<parallel>, #tpu.dimension_semantics<arbitrary>], iteration_bounds = array<i64: 2, 1, 4>, scalar_prefetch = 0 : i64, scratch_operands = 0 : i64, tpu.core_type = #tpu.core_type<tc>, window_params = [{transform_indices = @transform_0, window_bounds = array<i64: 1, 8, 32>}, {transform_indices = @transform_1, window_bounds = array<i64: 1, 32, 8>}, {transform_indices = @transform_2, window_bounds = array<i64: 1, 32, 8>}, {transform_indices = @transform_3, window_bounds = array<i64: 1, 32, 8>}, {transform_indices = @transform_4, window_bounds = array<i64: 1, 1, 8, 8>}, {transform_indices = @transform_5, window_bounds = array<i64: 1, 1, 8, 8>}, {transform_indices = @transform_6, window_bounds = array<i64: 1, 1, 8, 8>}]} {
    %c0 = arith.constant 0 : index
    %c0_0 = arith.constant 0 : index
    %c0_1 = arith.constant 0 : index
    %0 = vector.load %arg3[%c0, %c0_0, %c0_1] : memref<1x8x32xf32, #tpu.memory_space<vmem>>, vector<1x8x32xf32>
    %1 = vector.shape_cast %0 : vector<1x8x32xf32> to vector<8x32xf32>
    %c0_2 = arith.constant 0 : index
    %c0_3 = arith.constant 0 : index
    %c0_4 = arith.constant 0 : index
    %2 = vector.load %arg4[%c0_2, %c0_3, %c0_4] : memref<1x32x8xf32, #tpu.memory_space<vmem>>, vector<1x32x8xf32>
    %3 = vector.shape_cast %2 : vector<1x32x8xf32> to vector<32x8xf32>
    %cst = arith.constant dense<0.000000e+00> : vector<8x8xf32>
    %4 = tpu.matmul %1, %3, %cst {dimension_numbers = #tpu.dot_dimension_numbers<[1], [0], [0], [1], [0, 0, 1, 1], [], []>} : vector<8x32xf32>, vector<32x8xf32>, vector<8x8xf32> -> vector<8x8xf32>
    %c0_5 = arith.constant 0 : index
    %c0_6 = arith.constant 0 : index
    %c0_7 = arith.constant 0 : index
    %c0_8 = arith.constant 0 : index
    %5 = vector.load %arg7[%c0_5, %c0_6, %c0_7, %c0_8] : memref<1x1x8x8xf32, #tpu.memory_space<vmem>>, vector<1x1x8x8xf32>
    %6 = vector.shape_cast %5 : vector<1x1x8x8xf32> to vector<8x8xf32>
    %7 = vector.shape_cast %4 : vector<8x8xf32> to vector<1x1x8x8xf32>
    tpu.vector_store %arg7[%c0_5, %c0_6, %c0_7, %c0_8], %7 {strides = array<i32>} : memref<1x1x8x8xf32, #tpu.memory_space<vmem>>, vector<1x1x8x8xf32>,
    %c0_9 = arith.constant 0 : index
    %c0_10 = arith.constant 0 : index
    %c0_11 = arith.constant 0 : index
    %8 = vector.load %arg5[%c0_9, %c0_10, %c0_11] : memref<1x32x8xf32, #tpu.memory_space<vmem>>, vector<1x32x8xf32>
    %9 = vector.shape_cast %8 : vector<1x32x8xf32> to vector<32x8xf32>
    %cst_12 = arith.constant dense<0.000000e+00> : vector<8x8xf32>
    %10 = tpu.matmul %1, %9, %cst_12 {dimension_numbers = #tpu.dot_dimension_numbers<[1], [0], [0], [1], [0, 0, 1, 1], [], []>} : vector<8x32xf32>, vector<32x8xf32>, vector<8x8xf32> -> vector<8x8xf32>
    %c0_13 = arith.constant 0 : index
    %c0_14 = arith.constant 0 : index
    %c0_15 = arith.constant 0 : index
    %c0_16 = arith.constant 0 : index
    %11 = vector.load %arg8[%c0_13, %c0_14, %c0_15, %c0_16] : memref<1x1x8x8xf32, #tpu.memory_space<vmem>>, vector<1x1x8x8xf32>
    %12 = vector.shape_cast %11 : vector<1x1x8x8xf32> to vector<8x8xf32>
    %13 = vector.shape_cast %10 : vector<8x8xf32> to vector<1x1x8x8xf32>
    tpu.vector_store %arg8[%c0_13, %c0_14, %c0_15, %c0_16], %13 {strides = array<i32>} : memref<1x1x8x8xf32, #tpu.memory_space<vmem>>, vector<1x1x8x8xf32>,
    %c0_17 = arith.constant 0 : index
    %c0_18 = arith.constant 0 : index
    %c0_19 = arith.constant 0 : index
    %14 = vector.load %arg6[%c0_17, %c0_18, %c0_19] : memref<1x32x8xf32, #tpu.memory_space<vmem>>, vector<1x32x8xf32>
    %15 = vector.shape_cast %14 : vector<1x32x8xf32> to vector<32x8xf32>
    %cst_20 = arith.constant dense<0.000000e+00> : vector<8x8xf32>
    %16 = tpu.matmul %1, %15, %cst_20 {dimension_numbers = #tpu.dot_dimension_numbers<[1], [0], [0], [1], [0, 0, 1, 1], [], []>} : vector<8x32xf32>, vector<32x8xf32>, vector<8x8xf32> -> vector<8x8xf32>
    %c0_21 = arith.constant 0 : index
    %c0_22 = arith.constant 0 : index
    %c0_23 = arith.constant 0 : index
    %c0_24 = arith.constant 0 : index
    %17 = vector.load %arg9[%c0_21, %c0_22, %c0_23, %c0_24] : memref<1x1x8x8xf32, #tpu.memory_space<vmem>>, vector<1x1x8x8xf32>
    %18 = vector.shape_cast %17 : vector<1x1x8x8xf32> to vector<8x8xf32>
    %19 = vector.shape_cast %16 : vector<8x8xf32> to vector<1x1x8x8xf32>
    tpu.vector_store %arg9[%c0_21, %c0_22, %c0_23, %c0_24], %19 {strides = array<i32>} : memref<1x1x8x8xf32, #tpu.memory_space<vmem>>, vector<1x1x8x8xf32>,
    return
  }
  func.func @transform_0(%arg0: i32, %arg1: i32, %arg2: i32) -> (i32, i32, i32) {
    %c0_i32 = arith.constant 0 : i32
    %c0_i32_0 = arith.constant 0 : i32
    return %arg0, %arg1, %c0_i32 : i32, i32, i32
  }
  func.func @transform_1(%arg0: i32, %arg1: i32, %arg2: i32) -> (i32, i32, i32) {
    %c0_i32 = arith.constant 0 : i32
    %c0_i32_0 = arith.constant 0 : i32
    %c0_i32_1 = arith.constant 0 : i32
    return %arg2, %c0_i32, %c0_i32_0 : i32, i32, i32
  }
  func.func @transform_2(%arg0: i32, %arg1: i32, %arg2: i32) -> (i32, i32, i32) {
    %c0_i32 = arith.constant 0 : i32
    %c0_i32_0 = arith.constant 0 : i32
    %c0_i32_1 = arith.constant 0 : i32
    return %arg2, %c0_i32, %c0_i32_0 : i32, i32, i32
  }
  func.func @transform_3(%arg0: i32, %arg1: i32, %arg2: i32) -> (i32, i32, i32) {
    %c0_i32 = arith.constant 0 : i32
    %c0_i32_0 = arith.constant 0 : i32
    %c0_i32_1 = arith.constant 0 : i32
    return %arg2, %c0_i32, %c0_i32_0 : i32, i32, i32
  }
  func.func @transform_4(%arg0: i32, %arg1: i32, %arg2: i32) -> (i32, i32, i32, i32) {
    %c0_i32 = arith.constant 0 : i32
    %c0_i32_0 = arith.constant 0 : i32
    return %arg0, %arg2, %arg1, %c0_i32 : i32, i32, i32, i32
  }
  func.func @transform_5(%arg0: i32, %arg1: i32, %arg2: i32) -> (i32, i32, i32, i32) {
    %c0_i32 = arith.constant 0 : i32
    %c0_i32_0 = arith.constant 0 : i32
    return %arg0, %arg2, %arg1, %c0_i32 : i32, i32, i32, i32
  }
  func.func @transform_6(%arg0: i32, %arg1: i32, %arg2: i32) -> (i32, i32, i32, i32) {
    %c0_i32 = arith.constant 0 : i32
    %c0_i32_0 = arith.constant 0 : i32
    return %arg0, %arg2, %arg1, %c0_i32 : i32, i32, i32, i32
  }
}

</mosaic_0001>

<llo_original>
// kernel: tpu_custom_call.1
$region0: #{tpu_custom_call.1}
  #allocation0 [shape = 'u32[]', space=smem, size = 0x4, offset = 0x4, fixed_abs, tag = 'smem constant byte address 0x4 - core index']
  #allocation1 [shape = 'u32[144,128]{1,0:T(1,128)}', space=vmem, size = 0x12000, scoped, tag = 'internal scratch']
  %s0 = inlined_call_operand.vmem [shape: f32[2,8,32], index: 0, kind: input, shape index: {}]
  %s1 = inlined_call_operand.vmem [shape: f32[4,32,8], index: 1, kind: input, shape index: {}]
  %s2 = inlined_call_operand.vmem [shape: f32[4,32,8], index: 2, kind: input, shape index: {}]
  %s3 = inlined_call_operand.vmem [shape: f32[4,32,8], index: 3, kind: input, shape index: {}]
  %s4 = inlined_call_operand.hbm [shape: f32[2,4,8,8], index: 4, kind: output, shape index: {0}]
  %s5 = inlined_call_operand.hbm [shape: f32[2,4,8,8], index: 5, kind: output, shape index: {1}]
  %s6 = inlined_call_operand.hbm [shape: f32[2,4,8,8], index: 6, kind: output, shape index: {2}]
  %7 = xla_tuple %s4, %s5, %s6
  %s8 = sld [smem:[#allocation0]]
  $region65: #{tpu_custom_call.1} parent=0
    _
  %s10 = ssub.s32 1, %s8
  %s11 = scalar_select 0, %s10, %s8
  $region1: #{tpu_custom_call.1} parent=0
    #allocation2 [shape = 'u8[8192]{0}', space=vmem, size = 0x2000, scoped, tag = 'output window, operand 0']
    #allocation3 [shape = 's32[2]{0}', space=sflag, size = 0x8, scoped, tag = 'scoped memory for tpu_custom_call.1']
    #allocation4 [shape = 'u8[8192]{0}', space=vmem, size = 0x2000, scoped, tag = 'output window, operand 1']
    #allocation5 [shape = 's32[2]{0}', space=sflag, size = 0x8, scoped, tag = 'scoped memory for tpu_custom_call.1']
    #allocation6 [shape = 'u8[8192]{0}', space=vmem, size = 0x2000, scoped, tag = 'output window, operand 2']
    %12 = vsyncpa [#allocation3], 0
    %s13 = scalar_lea.sflag [#allocation3], 1
    %14 = vsyncpa %s13, 0
    %15 = vsyncpa [#allocation5], 0
    %s16 = scalar_lea.sflag [#allocation5], 1
    %17 = vsyncpa %s16, 0
    loop: start=0, step=1, limit=10
    $region2: #{tpu_custom_call.1} parent=1 // loop_pre_header
      _
    $region3: #{tpu_custom_call.1} parent=1 // loop_header
      %s19 = sphi 0, %s23
      %p20 = scmp.ge.s32.totalorder %s19, 10
      %s26 = sphi 0, %s45
      %s27 = sphi 0, %s41
      %s28 = sphi 0, %s37
      %s29 = sphi 0, %s26
      %s30 = sphi 0, %s27
      %s31 = sphi 0, %s28
      %s32 = sphi 0, %s29
      %s33 = sphi 0, %s30
      %s34 = sphi 0, %s31
      %s50 = sphi 0, %s52
      %s53 = sphi 0, %s50
      %s54 = sphi 0, %s53
      %s70 = sphi 0, %s54
      %s76 = sphi 0, %s78
      %s79 = sphi 0, %s76
      %s80 = sphi 0, %s79
      %s96 = sphi 0, %s80
      %s102 = sphi 0, %s104
      %s105 = sphi 0, %s102
      %s106 = sphi 0, %s105
      %s122 = sphi 0, %s106
      %s128 = sphi 0, %s130
      %s131 = sphi 0, %s128
      %s132 = sphi 0, %s131
      %s148 = sphi 0, %s132
      %s158 = sphi 0, %s160
      %s161 = sphi 0, %s158
      %s162 = sphi 0, %s161
      %s178 = sphi 0, %s162
      %s188 = sphi 0, %s190
      %s191 = sphi 0, %s188
      %s192 = sphi 0, %s191
      %s208 = sphi 0, %s192
      %s218 = sphi 0, %s220
      %s221 = sphi 0, %s218
      %s222 = sphi 0, %s221
      %s238 = sphi 0, %s222
    $region4: #{tpu_custom_call.1} parent=1 // loop_header_branch
      %22 = sbr.rel (%p20) target = $region8
    $region5: #{tpu_custom_call.1} parent=1 // loop_body
      %s24 = ssub.s32 %s19, 1
      %s25 = ssub.s32 %s19, 2
      %s35 = sadd.s32 1, %s28
      %p36 = scmp.ge.s32.totalorder %s35, 4
      %s37 = scalar_select %p36, 0, %s35
      %s38 = sadd.s32 1, %s27
      %s39 = scalar_select %p36, %s38, %s27
      %p40 = scmp.ge.s32.totalorder %s39, 1
      %s41 = scalar_select %p40, 0, %s39
      %s42 = sadd.s32 1, %s26
      %s43 = scalar_select %p40, %s42, %s26
      %p44 = scmp.ge.s32.totalorder %s43, 2
      %s45 = scalar_select %p44, 0, %s43
      %s46 = ssub.s32 %s26, %s45
      %s47 = ssub.s32 %s27, %s41
      %s48 = sor.u32 %s46, %s47
      %p49 = scmp.eq.s32.totalorder %s48, 0
      %s51 = sadd.s32 %s50, 1
      %s52 = scalar_select %p49, %s50, %s51
      %p55 = pneg %p49
      %p56 = scmp.eq.s32.totalorder %s19, 7
      %p57 = por %p55, %p56
      %p58 = scmp.ne.s32.totalorder %s50, %s53
      %p59 = scmp.eq.s32.totalorder %s19, 0
      %p60 = por %p58, %p59
      %p61 = scmp.ne.s32.totalorder %s50, %s53
      %p62 = scmp.eq.s32.totalorder %s24, 7
      %p63 = por %p61, %p62
      %p64 = scmp.ne.s32.totalorder %s53, %s54
      %p65 = scmp.eq.s32.totalorder %s24, 0
      %p66 = por %p64, %p65
      %p67 = scmp.ne.s32.totalorder %s53, %s54
      %p68 = scmp.eq.s32.totalorder %s25, 7
      %p69 = por %p67, %p68
      %p71 = scmp.ne.s32.totalorder %s54, %s70
      %p72 = scmp.eq.s32.totalorder %s25, 0
      %p73 = por %p71, %p72
      %s74 = ssub.s32 %s28, %s37
      %p75 = scmp.eq.s32.totalorder %s74, 0
      %s77 = sadd.s32 %s76, 1
      %s78 = scalar_select %p75, %s76, %s77
      %p81 = pneg %p75
      %p82 = scmp.eq.s32.totalorder %s19, 7
      %p83 = por %p81, %p82
      %p84 = scmp.ne.s32.totalorder %s76, %s79
      %p85 = scmp.eq.s32.totalorder %s19, 0
      %p86 = por %p84, %p85
      %p87 = scmp.ne.s32.totalorder %s76, %s79
      %p88 = scmp.eq.s32.totalorder %s24, 7
      %p89 = por %p87, %p88
      %p90 = scmp.ne.s32.totalorder %s79, %s80
      %p91 = scmp.eq.s32.totalorder %s24, 0
      %p92 = por %p90, %p91
      %p93 = scmp.ne.s32.totalorder %s79, %s80
      %p94 = scmp.eq.s32.totalorder %s25, 7
      %p95 = por %p93, %p94
      %p97 = scmp.ne.s32.totalorder %s80, %s96
      %p98 = scmp.eq.s32.totalorder %s25, 0
      %p99 = por %p97, %p98
      %s100 = ssub.s32 %s28, %s37
      %p101 = scmp.eq.s32.totalorder %s100, 0
      %s103 = sadd.s32 %s102, 1
      %s104 = scalar_select %p101, %s102, %s103
      %p107 = pneg %p101
      %p108 = scmp.eq.s32.totalorder %s19, 7
      %p109 = por %p107, %p108
      %p110 = scmp.ne.s32.totalorder %s102, %s105
      %p111 = scmp.eq.s32.totalorder %s19, 0
      %p112 = por %p110, %p111
      %p113 = scmp.ne.s32.totalorder %s102, %s105
      %p114 = scmp.eq.s32.totalorder %s24, 7
      %p115 = por %p113, %p114
      %p116 = scmp.ne.s32.totalorder %s105, %s106
      %p117 = scmp.eq.s32.totalorder %s24, 0
      %p118 = por %p116, %p117
      %p119 = scmp.ne.s32.totalorder %s105, %s106
      %p120 = scmp.eq.s32.totalorder %s25, 7
      %p121 = por %p119, %p120
      %p123 = scmp.ne.s32.totalorder %s106, %s122
      %p124 = scmp.eq.s32.totalorder %s25, 0
      %p125 = por %p123, %p124
      %s126 = ssub.s32 %s28, %s37
      %p127 = scmp.eq.s32.totalorder %s126, 0
      %s129 = sadd.s32 %s128, 1
      %s130 = scalar_select %p127, %s128, %s129
      %p133 = pneg %p127
      %p134 = scmp.eq.s32.totalorder %s19, 7
      %p135 = por %p133, %p134
      %p136 = scmp.ne.s32.totalorder %s128, %s131
      %p137 = scmp.eq.s32.totalorder %s19, 0
      %p138 = por %p136, %p137
      %p139 = scmp.ne.s32.totalorder %s128, %s131
      %p140 = scmp.eq.s32.totalorder %s24, 7
      %p141 = por %p139, %p140
      %p142 = scmp.ne.s32.totalorder %s131, %s132
      %p143 = scmp.eq.s32.totalorder %s24, 0
      %p144 = por %p142, %p143
      %p145 = scmp.ne.s32.totalorder %s131, %s132
      %p146 = scmp.eq.s32.totalorder %s25, 7
      %p147 = por %p145, %p146
      %p149 = scmp.ne.s32.totalorder %s132, %s148
      %p150 = scmp.eq.s32.totalorder %s25, 0
      %p151 = por %p149, %p150
      %s152 = ssub.s32 %s26, %s45
      %s153 = ssub.s32 %s28, %s37
      %s154 = sor.u32 %s152, %s153
      %s155 = ssub.s32 %s27, %s41
      %s156 = sor.u32 %s154, %s155
      %p157 = scmp.eq.s32.totalorder %s156, 0
      %s159 = sadd.s32 %s158, 1
      %s160 = scalar_select %p157, %s158, %s159
      %p163 = pneg %p157
      %p164 = scmp.eq.s32.totalorder %s19, 7
      %p165 = por %p163, %p164
      %p166 = scmp.ne.s32.totalorder %s158, %s161
      %p167 = scmp.eq.s32.totalorder %s19, 0
      %p168 = por %p166, %p167
      %p169 = scmp.ne.s32.totalorder %s158, %s161
      %p170 = scmp.eq.s32.totalorder %s24, 7
      %p171 = por %p169, %p170
      %p172 = scmp.ne.s32.totalorder %s161, %s162
      %p173 = scmp.eq.s32.totalorder %s24, 0
      %p174 = por %p172, %p173
      %p175 = scmp.ne.s32.totalorder %s161, %s162
      %p176 = scmp.eq.s32.totalorder %s25, 7
      %p177 = por %p175, %p176
      %p179 = scmp.ne.s32.totalorder %s162, %s178
      %p180 = scmp.eq.s32.totalorder %s25, 0
      %p181 = por %p179, %p180
      %s182 = ssub.s32 %s26, %s45
      %s183 = ssub.s32 %s28, %s37
      %s184 = sor.u32 %s182, %s183
      %s185 = ssub.s32 %s27, %s41
      %s186 = sor.u32 %s184, %s185
      %p187 = scmp.eq.s32.totalorder %s186, 0
      %s189 = sadd.s32 %s188, 1
      %s190 = scalar_select %p187, %s188, %s189
      %p193 = pneg %p187
      %p194 = scmp.eq.s32.totalorder %s19, 7
      %p195 = por %p193, %p194
      %p196 = scmp.ne.s32.totalorder %s188, %s191
      %p197 = scmp.eq.s32.totalorder %s19, 0
      %p198 = por %p196, %p197
      %p199 = scmp.ne.s32.totalorder %s188, %s191
      %p200 = scmp.eq.s32.totalorder %s24, 7
      %p201 = por %p199, %p200
      %p202 = scmp.ne.s32.totalorder %s191, %s192
      %p203 = scmp.eq.s32.totalorder %s24, 0
      %p204 = por %p202, %p203
      %p205 = scmp.ne.s32.totalorder %s191, %s192
      %p206 = scmp.eq.s32.totalorder %s25, 7
      %p207 = por %p205, %p206
      %p209 = scmp.ne.s32.totalorder %s192, %s208
      %p210 = scmp.eq.s32.totalorder %s25, 0
      %p211 = por %p209, %p210
      %s212 = ssub.s32 %s26, %s45
      %s213 = ssub.s32 %s28, %s37
      %s214 = sor.u32 %s212, %s213
      %s215 = ssub.s32 %s27, %s41
      %s216 = sor.u32 %s214, %s215
      %p217 = scmp.eq.s32.totalorder %s216, 0
      %s219 = sadd.s32 %s218, 1
      %s220 = scalar_select %p217, %s218, %s219
      %p223 = pneg %p217
      %p224 = scmp.eq.s32.totalorder %s19, 7
      %p225 = por %p223, %p224
      %p226 = scmp.ne.s32.totalorder %s218, %s221
      %p227 = scmp.eq.s32.totalorder %s19, 0
      %p228 = por %p226, %p227
      %p229 = scmp.ne.s32.totalorder %s218, %s221
      %p230 = scmp.eq.s32.totalorder %s24, 7
      %p231 = por %p229, %p230
      %p232 = scmp.ne.s32.totalorder %s221, %s222
      %p233 = scmp.eq.s32.totalorder %s24, 0
      %p234 = por %p232, %p233
      %p235 = scmp.ne.s32.totalorder %s221, %s222
      %p236 = scmp.eq.s32.totalorder %s25, 7
      %p237 = por %p235, %p236
      %p239 = scmp.ne.s32.totalorder %s222, %s238
      %p240 = scmp.eq.s32.totalorder %s25, 0
      %p241 = por %p239, %p240
      %p242 = scmp.le.s32.totalorder 1, %s19
      %p243 = scmp.lt.s32.totalorder %s19, 9
      %p244 = pnand %p242, %p243
      %p245 = pneg %p244
      // Predicated region
      $region9: #{tpu_custom_call.1} parent=5 // pred_check
        _
      $region10: #{tpu_custom_call.1} parent=5 // pred_check_branch
        %247 = sbr.rel (%p244) target = $region12
      $region11: #{tpu_custom_call.1} parent=5 // pred_region
        %s248 = ssub.s32 %s19, 1
      $region12: #{tpu_custom_call.1} parent=5 // pred_fallthru
        _
      %p249 = scmp.lt.s32.totalorder %s19, 8
      // Predicated region
      $region13: #{tpu_custom_call.1} parent=5 // pred_check
        %p250 = pneg %p249
      $region14: #{tpu_custom_call.1} parent=5 // pred_check_branch
        %252 = sbr.rel (%p250) target = $region16
      $region15: #{tpu_custom_call.1} parent=5 // pred_region
        // Predicated region
        $region17: #{tpu_custom_call.1} parent=15 // pred_check
          %p253 = pneg %p60
        $region18: #{tpu_custom_call.1} parent=15 // pred_check_branch
          %255 = sbr.rel (%p253) target = $region20
        $region19: #{tpu_custom_call.1} parent=15 // pred_region
          %p256 = scmp.lt.s32.totalorder %s26, 1
          %s257 = scalar_select %p256, %s26, 1
          %p258 = scmp.lt.s32.totalorder %s27, 0
          %s259 = scalar_select %p258, %s27, 0
          %s260 = sadd.s32 %s259, %s257
          %s261 = smul.addr %s260, 8
          %s262 = scalar_lea.vmem %s0, %s261
        $region20: #{tpu_custom_call.1} parent=15 // pred_fallthru
          _
        // Predicated region
        $region21: #{tpu_custom_call.1} parent=15 // pred_check
          %p263 = pneg %p86
        $region22: #{tpu_custom_call.1} parent=15 // pred_check_branch
          %265 = sbr.rel (%p263) target = $region24
        $region23: #{tpu_custom_call.1} parent=15 // pred_region
          %p266 = scmp.lt.s32.totalorder %s28, 3
          %s267 = scalar_select %p266, %s28, 3
          %s268 = smul.addr %s267, 4
          %s269 = smul.addr %s268, 8
          %s270 = scalar_lea.vmem %s1, %s269
        $region24: #{tpu_custom_call.1} parent=15 // pred_fallthru
          _
        // Predicated region
        $region25: #{tpu_custom_call.1} parent=15 // pred_check
          %p271 = pneg %p112
        $region26: #{tpu_custom_call.1} parent=15 // pred_check_branch
          %273 = sbr.rel (%p271) target = $region28
        $region27: #{tpu_custom_call.1} parent=15 // pred_region
          %p274 = scmp.lt.s32.totalorder %s28, 3
          %s275 = scalar_select %p274, %s28, 3
          %s276 = smul.addr %s275, 4
          %s277 = smul.addr %s276, 8
          %s278 = scalar_lea.vmem %s2, %s277
        $region28: #{tpu_custom_call.1} parent=15 // pred_fallthru
          _
        // Predicated region
        $region29: #{tpu_custom_call.1} parent=15 // pred_check
          %p279 = pneg %p138
        $region30: #{tpu_custom_call.1} parent=15 // pred_check_branch
          %281 = sbr.rel (%p279) target = $region32
        $region31: #{tpu_custom_call.1} parent=15 // pred_region
          %p282 = scmp.lt.s32.totalorder %s28, 3
          %s283 = scalar_select %p282, %s28, 3
          %s284 = smul.addr %s283, 4
          %s285 = smul.addr %s284, 8
          %s286 = scalar_lea.vmem %s3, %s285
        $region32: #{tpu_custom_call.1} parent=15 // pred_fallthru
          _
      $region16: #{tpu_custom_call.1} parent=5 // pred_fallthru
        _
      %p287 = scmp.le.s32.totalorder 1, %s19
      %p288 = scmp.lt.s32.totalorder %s19, 9
      %p289 = pnand %p287, %p288
      %p290 = pneg %p289
      // Predicated region
      $region33: #{tpu_custom_call.1} parent=5 // pred_check
        _
      $region34: #{tpu_custom_call.1} parent=5 // pred_check_branch
        %292 = sbr.rel (%p289) target = $region36
      $region35: #{tpu_custom_call.1} parent=5 // pred_region
        %s293 = ssub.s32 %s19, 1
        %p294 = scmp.lt.s32.totalorder %s29, 1
        %s295 = scalar_select %p294, %s29, 1
        %p296 = scmp.lt.s32.totalorder %s30, 0
        %s297 = scalar_select %p296, %s30, 0
        %s298 = sadd.s32 %s297, %s295
        %s299 = smul.addr %s298, 8
        %s300 = scalar_lea.vmem %s0, %s299
        %p301 = pneg %p66
        %p302 = pneg %p63
        %p303 = scmp.lt.s32.totalorder %s31, 3
        %s304 = scalar_select %p303, %s31, 3
        %s305 = smul.addr %s304, 4
        %s306 = smul.addr %s305, 8
        %s307 = scalar_lea.vmem %s1, %s306
        %p308 = pneg %p92
        %p309 = pneg %p89
        %p310 = scmp.lt.s32.totalorder %s31, 3
        %s311 = scalar_select %p310, %s31, 3
        %s312 = smul.addr %s311, 4
        %s313 = smul.addr %s312, 8
        %s314 = scalar_lea.vmem %s2, %s313
        %p315 = pneg %p118
        %p316 = pneg %p115
        %p317 = scmp.lt.s32.totalorder %s31, 3
        %s318 = scalar_select %p317, %s31, 3
        %s319 = smul.addr %s318, 4
        %s320 = smul.addr %s319, 8
        %s321 = scalar_lea.vmem %s3, %s320
        %p322 = pneg %p144
        %p323 = pneg %p141
        %p324 = pneg %p174
        %p325 = pneg %p171
        %s326 = sand.u32 %s161, 1
        %s327 = scalar_lea.sflag [#allocation3], %s326
        %s328 = sand.u32 %s161, 1
        %s329 = smul.addr %s328, 8
        %s330 = scalar_lea.vmem [#allocation2], %s329
        %p331 = pneg %p204
        %p332 = pneg %p201
        %s333 = sand.u32 %s24, 1
        %s334 = scalar_lea.sflag [#allocation5], %s333
        %s335 = sand.u32 %s191, 1
        %s336 = smul.addr %s335, 8
        %s337 = scalar_lea.vmem [#allocation4], %s336
        %p338 = pneg %p234
        %p339 = pneg %p231
        %s340 = sand.u32 %s24, 1
        %s341 = scalar_lea.sflag [#allocation5], %s340
        %s342 = sand.u32 %s221, 1
        %s343 = smul.addr %s342, 8
        %s344 = scalar_lea.vmem [#allocation6], %s343
        %p345 = scmp.lt.s32.totalorder %s29, 1
        %s346 = scalar_select %p345, %s29, 1
        %p347 = scmp.lt.s32.totalorder %s30, 0
        %s348 = scalar_select %p347, %s30, 0
        %s349 = sadd.s32 %s348, %s346
        %s350 = smul.addr %s349, 8
        %s351 = scalar_lea.vmem %s0, %s350
        %p352 = scmp.lt.s32.totalorder %s31, 3
        %s353 = scalar_select %p352, %s31, 3
        %s354 = smul.addr %s353, 4
        %s355 = smul.addr %s354, 8
        %s356 = scalar_lea.vmem %s1, %s355
        %p357 = scmp.lt.s32.totalorder %s31, 3
        %s358 = scalar_select %p357, %s31, 3
        %s359 = smul.addr %s358, 4
        %s360 = smul.addr %s359, 8
        %s361 = scalar_lea.vmem %s2, %s360
        %p362 = scmp.lt.s32.totalorder %s31, 3
        %s363 = scalar_select %p362, %s31, 3
        %s364 = smul.addr %s363, 4
        %s365 = smul.addr %s364, 8
        %s366 = scalar_lea.vmem %s3, %s365
        %v367 = vld [vmem:[%s351] sm:$0xff]
        %v368 = vld [vmem:[%s356] sm:$0xff]
        %v369 = vld [vmem:[%s356 + $0x8] sm:$0xff]
        %v370 = vld [vmem:[%s356 + $0x10] sm:$0xff]
        %v371 = vld [vmem:[%s356 + $0x18] sm:$0xff]
        %vm372 = vcmask 261120
        %v374 = vsel %vm372, %v367, 0
        %376 = vmatprep.subr.mxu0 0.0
        %377 = vmatpush1.msra.mxu0 %v368
        %378 = vmatprep.subr.mxu0 0.0
        %379 = vmatpush1.msra.mxu0 %v369
        %380 = vmatprep.subr.mxu0 0.0
        %381 = vmatpush1.msra.mxu0 %v370
        %382 = vmatprep.subr.mxu0 0.0
        %383 = vmatpush1.msra.mxu0 %v371
        %384 = vmatprep.subr.mxu0 0.0
        %385 = vmatpush1.msra.mxu0 0.0
        %386 = vmatprep.subr.mxu0 0.0
        %387 = vmatpush1.msra.mxu0 0.0
        %388 = vmatprep.subr.mxu0 0.0
        %389 = vmatpush1.msra.mxu0 0.0
        %390 = vmatprep.subr.mxu0 0.0
        %391 = vmatpush1.msra.mxu0 0.0
        %392 = vmatprep.subr.mxu0 0.0
        %393 = vmatpush1.msra.mxu0 0.0
        %394 = vmatprep.subr.mxu0 0.0
        %395 = vmatpush1.msra.mxu0 0.0
        %396 = vmatprep.subr.mxu0 0.0
        %397 = vmatpush1.msra.mxu0 0.0
        %398 = vmatprep.subr.mxu0 0.0
        %399 = vmatpush1.msra.mxu0 0.0
        %400 = vmatprep.subr.mxu0 0.0
        %401 = vmatpush1.msra.mxu0 0.0
        %402 = vmatprep.subr.mxu0 0.0
        %403 = vmatpush1.msra.mxu0 0.0
        %404 = vmatprep.subr.mxu0 0.0
        %405 = vmatpush1.msra.mxu0 0.0
        %406 = vmatprep.subr.mxu0 0.0
        %407 = vmatpush1.msra.mxu0 0.0
        %408 = vmatprep.subr.mxu0 0.0
        %409 = vmatpush1.msra.mxu0 0.0
        %410 = vmatprep.subr.mxu0 0.0
        %411 = vmatpush1.msra.mxu0 0.0
        %412 = vmatprep.subr.mxu0 0.0
        %413 = vmatpush1.msra.mxu0 0.0
        %414 = vmatprep.subr.mxu0 0.0
        %415 = vmatpush1.msra.mxu0 0.0
        %416 = vmatprep.subr.mxu0 0.0
        %417 = vmatpush1.msra.mxu0 0.0
        %418 = vmatprep.subr.mxu0 0.0
        %419 = vmatpush1.msra.mxu0 0.0
        %420 = vmatprep.subr.mxu0 0.0
        %421 = vmatpush1.msra.mxu0 0.0
        %422 = vmatprep.subr.mxu0 0.0
        %423 = vmatpush1.msra.mxu0 0.0
        %424 = vmatprep.subr.mxu0 0.0
        %425 = vmatpush1.msra.mxu0 0.0
        %426 = vmatprep.subr.mxu0 0.0
        %427 = vmatpush1.msra.mxu0 0.0
        %428 = vmatprep.subr.mxu0 0.0
        %429 = vmatpush1.msra.mxu0 0.0
        %430 = vmatprep.subr.mxu0 0.0
        %431 = vmatpush1.msra.mxu0 0.0
        %432 = vmatprep.subr.mxu0 0.0
        %433 = vmatpush1.msra.mxu0 0.0
        %434 = vmatprep.subr.mxu0 0.0
        %435 = vmatpush1.msra.mxu0 0.0
        %436 = vmatprep.subr.mxu0 0.0
        %437 = vmatpush1.msra.mxu0 0.0
        %438 = vmatprep.subr.mxu0 0.0
        %439 = vmatpush1.msra.mxu0 0.0
        %440 = vmatprep.mubr.f32.mxu0 0.0
        %441 = vmatmul.mubr.f32.gmra.mrb[0].mxu0 %v374
        %v442 = vpop.f32.mrb[0].mxu0
        %v443 = vadd.f32 0.0, %v442
        %v444 = vpop.f32.mrb[0].mxu0
        %445 = vdwg.mxu0
        %vm446 = vcmask 64512
        %447 = vst.msk [vmem:[%s330] sm:$0xff] %vm446, %v443
        %v448 = vld [vmem:[%s361] sm:$0xff]
        %v449 = vld [vmem:[%s361 + $0x8] sm:$0xff]
        %v450 = vld [vmem:[%s361 + $0x10] sm:$0xff]
        %v451 = vld [vmem:[%s361 + $0x18] sm:$0xff]
        %452 = vmatprep.subr.mxu0 0.0
        %453 = vmatpush1.msra.mxu0 %v448
        %454 = vmatprep.subr.mxu0 0.0
        %455 = vmatpush1.msra.mxu0 %v449
        %456 = vmatprep.subr.mxu0 0.0
        %457 = vmatpush1.msra.mxu0 %v450
        %458 = vmatprep.subr.mxu0 0.0
        %459 = vmatpush1.msra.mxu0 %v451
        %460 = vmatprep.subr.mxu0 0.0
        %461 = vmatpush1.msra.mxu0 0.0
        %462 = vmatprep.subr.mxu0 0.0
        %463 = vmatpush1.msra.mxu0 0.0
        %464 = vmatprep.subr.mxu0 0.0
        %465 = vmatpush1.msra.mxu0 0.0
        %466 = vmatprep.subr.mxu0 0.0
        %467 = vmatpush1.msra.mxu0 0.0
        %468 = vmatprep.subr.mxu0 0.0
        %469 = vmatpush1.msra.mxu0 0.0
        %470 = vmatprep.subr.mxu0 0.0
        %471 = vmatpush1.msra.mxu0 0.0
        %472 = vmatprep.subr.mxu0 0.0
        %473 = vmatpush1.msra.mxu0 0.0
        %474 = vmatprep.subr.mxu0 0.0
        %475 = vmatpush1.msra.mxu0 0.0
        %476 = vmatprep.subr.mxu0 0.0
        %477 = vmatpush1.msra.mxu0 0.0
        %478 = vmatprep.subr.mxu0 0.0
        %479 = vmatpush1.msra.mxu0 0.0
        %480 = vmatprep.subr.mxu0 0.0
        %481 = vmatpush1.msra.mxu0 0.0
        %482 = vmatprep.subr.mxu0 0.0
        %483 = vmatpush1.msra.mxu0 0.0
        %484 = vmatprep.subr.mxu0 0.0
        %485 = vmatpush1.msra.mxu0 0.0
        %486 = vmatprep.subr.mxu0 0.0
        %487 = vmatpush1.msra.mxu0 0.0
        %488 = vmatprep.subr.mxu0 0.0
        %489 = vmatpush1.msra.mxu0 0.0
        %490 = vmatprep.subr.mxu0 0.0
        %491 = vmatpush1.msra.mxu0 0.0
        %492 = vmatprep.subr.mxu0 0.0
        %493 = vmatpush1.msra.mxu0 0.0
        %494 = vmatprep.subr.mxu0 0.0
        %495 = vmatpush1.msra.mxu0 0.0
        %496 = vmatprep.subr.mxu0 0.0
        %497 = vmatpush1.msra.mxu0 0.0
        %498 = vmatprep.subr.mxu0 0.0
        %499 = vmatpush1.msra.mxu0 0.0
        %500 = vmatprep.subr.mxu0 0.0
        %501 = vmatpush1.msra.mxu0 0.0
        %502 = vmatprep.subr.mxu0 0.0
        %503 = vmatpush1.msra.mxu0 0.0
        %504 = vmatprep.subr.mxu0 0.0
        %505 = vmatpush1.msra.mxu0 0.0
        %506 = vmatprep.subr.mxu0 0.0
        %507 = vmatpush1.msra.mxu0 0.0
        %508 = vmatprep.subr.mxu0 0.0
        %509 = vmatpush1.msra.mxu0 0.0
        %510 = vmatprep.subr.mxu0 0.0
        %511 = vmatpush1.msra.mxu0 0.0
        %512 = vmatprep.subr.mxu0 0.0
        %513 = vmatpush1.msra.mxu0 0.0
        %514 = vmatprep.subr.mxu0 0.0
        %515 = vmatpush1.msra.mxu0 0.0
        %516 = vmatprep.mubr.f32.mxu0 0.0
        %517 = vmatmul.mubr.f32.gmra.mrb[0].mxu0 %v374
        %v518 = vpop.f32.mrb[0].mxu0
        %v519 = vadd.f32 0.0, %v518
        %v520 = vpop.f32.mrb[0].mxu0
        %521 = vdwg.mxu0
        %522 = vst.msk [vmem:[%s337] sm:$0xff] %vm446, %v519
        %v523 = vld [vmem:[%s366] sm:$0xff]
        %v524 = vld [vmem:[%s366 + $0x8] sm:$0xff]
        %v525 = vld [vmem:[%s366 + $0x10] sm:$0xff]
        %v526 = vld [vmem:[%s366 + $0x18] sm:$0xff]
        %527 = vmatprep.subr.mxu0 0.0
        %528 = vmatpush1.msra.mxu0 %v523
        %529 = vmatprep.subr.mxu0 0.0
        %530 = vmatpush1.msra.mxu0 %v524
        %531 = vmatprep.subr.mxu0 0.0
        %532 = vmatpush1.msra.mxu0 %v525
        %533 = vmatprep.subr.mxu0 0.0
        %534 = vmatpush1.msra.mxu0 %v526
        %535 = vmatprep.subr.mxu0 0.0
        %536 = vmatpush1.msra.mxu0 0.0
        %537 = vmatprep.subr.mxu0 0.0
        %538 = vmatpush1.msra.mxu0 0.0
        %539 = vmatprep.subr.mxu0 0.0
        %540 = vmatpush1.msra.mxu0 0.0
        %541 = vmatprep.subr.mxu0 0.0
        %542 = vmatpush1.msra.mxu0 0.0
        %543 = vmatprep.subr.mxu0 0.0
        %544 = vmatpush1.msra.mxu0 0.0
        %545 = vmatprep.subr.mxu0 0.0
        %546 = vmatpush1.msra.mxu0 0.0
        %547 = vmatprep.subr.mxu0 0.0
        %548 = vmatpush1.msra.mxu0 0.0
        %549 = vmatprep.subr.mxu0 0.0
        %550 = vmatpush1.msra.mxu0 0.0
        %551 = vmatprep.subr.mxu0 0.0
        %552 = vmatpush1.msra.mxu0 0.0
        %553 = vmatprep.subr.mxu0 0.0
        %554 = vmatpush1.msra.mxu0 0.0
        %555 = vmatprep.subr.mxu0 0.0
        %556 = vmatpush1.msra.mxu0 0.0
        %557 = vmatprep.subr.mxu0 0.0
        %558 = vmatpush1.msra.mxu0 0.0
        %559 = vmatprep.subr.mxu0 0.0
        %560 = vmatpush1.msra.mxu0 0.0
        %561 = vmatprep.subr.mxu0 0.0
        %562 = vmatpush1.msra.mxu0 0.0
        %563 = vmatprep.subr.mxu0 0.0
        %564 = vmatpush1.msra.mxu0 0.0
        %565 = vmatprep.subr.mxu0 0.0
        %566 = vmatpush1.msra.mxu0 0.0
        %567 = vmatprep.subr.mxu0 0.0
        %568 = vmatpush1.msra.mxu0 0.0
        %569 = vmatprep.subr.mxu0 0.0
        %570 = vmatpush1.msra.mxu0 0.0
        %571 = vmatprep.subr.mxu0 0.0
        %572 = vmatpush1.msra.mxu0 0.0
        %573 = vmatprep.subr.mxu0 0.0
        %574 = vmatpush1.msra.mxu0 0.0
        %575 = vmatprep.subr.mxu0 0.0
        %576 = vmatpush1.msra.mxu0 0.0
        %577 = vmatprep.subr.mxu0 0.0
        %578 = vmatpush1.msra.mxu0 0.0
        %579 = vmatprep.subr.mxu0 0.0
        %580 = vmatpush1.msra.mxu0 0.0
        %581 = vmatprep.subr.mxu0 0.0
        %582 = vmatpush1.msra.mxu0 0.0
        %583 = vmatprep.subr.mxu0 0.0
        %584 = vmatpush1.msra.mxu0 0.0
        %585 = vmatprep.subr.mxu0 0.0
        %586 = vmatpush1.msra.mxu0 0.0
        %587 = vmatprep.subr.mxu0 0.0
        %588 = vmatpush1.msra.mxu0 0.0
        %589 = vmatprep.subr.mxu0 0.0
        %590 = vmatpush1.msra.mxu0 0.0
        %591 = vmatprep.mubr.f32.mxu0 0.0
        %592 = vmatmul.mubr.f32.gmra.mrb[0].mxu0 %v374
        %v593 = vpop.f32.mrb[0].mxu0
        %v594 = vadd.f32 0.0, %v593
        %v595 = vpop.f32.mrb[0].mxu0
        %596 = vdwg.mxu0
        %597 = vst.msk [vmem:[%s344] sm:$0xff] %vm446, %v594
        %s598 = sand.u32 %s161, 1
        %s599 = scalar_lea.sflag [#allocation3], %s598
        %s600 = sand.u32 %s161, 1
        %s601 = smul.addr %s600, 8
        %s602 = scalar_lea.vmem [#allocation2], %s601
        %s603 = sand.u32 %s24, 1
        %s604 = scalar_lea.sflag [#allocation5], %s603
        %s605 = sand.u32 %s191, 1
        %s606 = smul.addr %s605, 8
        %s607 = scalar_lea.vmem [#allocation4], %s606
        %s608 = sand.u32 %s24, 1
        %s609 = scalar_lea.sflag [#allocation5], %s608
        %s610 = sand.u32 %s221, 1
        %s611 = smul.addr %s610, 8
        %s612 = scalar_lea.vmem [#allocation6], %s611
        // Predicated region
        $region37: #{tpu_custom_call.1} parent=35 // pred_check
          %p613 = pneg %p171
        $region38: #{tpu_custom_call.1} parent=35 // pred_check_branch
          %615 = sbr.rel (%p613) target = $region40
        $region39: #{tpu_custom_call.1} parent=35 // pred_region
          %s617 = ssub.s32 128, 128
          %618 = vsyncadd %s599, %s617
          %s619 = sadd.s32 %s30, %s31
          %s620 = smul.addr %s29, 4
          %s621 = sadd.s32 %s619, %s620
          %s622 = smul.addr %s621, 128
          %s623 = scalar_lea.hbm %s4, %s622
          %s625 = sshll.u32 %s602, 4
          %s626 = int_to_ptr.vmem [resolvable:$true] %s625
          %628 = dma.vmem_to_hbm [thread:$0]  %s626, 128, %s623, %s599
        $region40: #{tpu_custom_call.1} parent=35 // pred_fallthru
          _
        // Predicated region
        $region41: #{tpu_custom_call.1} parent=35 // pred_check
          %p629 = pneg %p201
        $region42: #{tpu_custom_call.1} parent=35 // pred_check_branch
          %631 = sbr.rel (%p629) target = $region44
        $region43: #{tpu_custom_call.1} parent=35 // pred_region
          %s633 = ssub.s32 128, 128
          %634 = vsyncadd %s604, %s633
          %s635 = sadd.s32 %s30, %s31
          %s636 = smul.addr %s29, 4
          %s637 = sadd.s32 %s635, %s636
          %s638 = smul.addr %s637, 128
          %s639 = scalar_lea.hbm %s5, %s638
          %s641 = sshll.u32 %s607, 4
          %s642 = int_to_ptr.vmem [resolvable:$true] %s641
          %644 = dma.vmem_to_hbm [thread:$0]  %s642, 128, %s639, %s604
        $region44: #{tpu_custom_call.1} parent=35 // pred_fallthru
          _
        // Predicated region
        $region45: #{tpu_custom_call.1} parent=35 // pred_check
          %p645 = pneg %p231
        $region46: #{tpu_custom_call.1} parent=35 // pred_check_branch
          %647 = sbr.rel (%p645) target = $region48
        $region47: #{tpu_custom_call.1} parent=35 // pred_region
          %s649 = ssub.s32 128, 128
          %650 = vsyncadd %s609, %s649
          %s651 = sadd.s32 %s30, %s31
          %s652 = smul.addr %s29, 4
          %s653 = sadd.s32 %s651, %s652
          %s654 = smul.addr %s653, 128
          %s655 = scalar_lea.hbm %s6, %s654
          %s657 = sshll.u32 %s612, 4
          %s658 = int_to_ptr.vmem [resolvable:$true] %s657
          %660 = dma.vmem_to_hbm [thread:$0]  %s658, 128, %s655, %s609
        $region48: #{tpu_custom_call.1} parent=35 // pred_fallthru
          _
      $region36: #{tpu_custom_call.1} parent=5 // pred_fallthru
        _
      %p661 = scmp.le.s32.totalorder 2, %s19
      // Predicated region
      $region49: #{tpu_custom_call.1} parent=5 // pred_check
        %p662 = pneg %p661
      $region50: #{tpu_custom_call.1} parent=5 // pred_check_branch
        %664 = sbr.rel (%p662) target = $region52
      $region51: #{tpu_custom_call.1} parent=5 // pred_region
        %s665 = ssub.s32 %s19, 2
        // Predicated region
        $region53: #{tpu_custom_call.1} parent=51 // pred_check
          %p666 = pneg %p177
        $region54: #{tpu_custom_call.1} parent=51 // pred_check_branch
          %668 = sbr.rel (%p666) target = $region56
        $region55: #{tpu_custom_call.1} parent=51 // pred_region
          %s669 = sand.u32 %s162, 1
          %s670 = scalar_lea.sflag [#allocation3], %s669
          %s671 = sand.u32 %s162, 1
          %s672 = smul.addr %s671, 8
          %s673 = scalar_lea.vmem [#allocation2], %s672
          %674 = dma.done %s670, 128
        $region56: #{tpu_custom_call.1} parent=51 // pred_fallthru
          _
        // Predicated region
        $region57: #{tpu_custom_call.1} parent=51 // pred_check
          %p675 = pneg %p207
        $region58: #{tpu_custom_call.1} parent=51 // pred_check_branch
          %677 = sbr.rel (%p675) target = $region60
        $region59: #{tpu_custom_call.1} parent=51 // pred_region
          %s678 = sand.u32 %s25, 1
          %s679 = scalar_lea.sflag [#allocation5], %s678
          %s680 = sand.u32 %s192, 1
          %s681 = smul.addr %s680, 8
          %s682 = scalar_lea.vmem [#allocation4], %s681
          %683 = dma.done %s679, 128
        $region60: #{tpu_custom_call.1} parent=51 // pred_fallthru
          _
        // Predicated region
        $region61: #{tpu_custom_call.1} parent=51 // pred_check
          %p684 = pneg %p237
        $region62: #{tpu_custom_call.1} parent=51 // pred_check_branch
          %686 = sbr.rel (%p684) target = $region64
        $region63: #{tpu_custom_call.1} parent=51 // pred_region
          %s687 = sand.u32 %s25, 1
          %s688 = scalar_lea.sflag [#allocation5], %s687
          %s689 = sand.u32 %s222, 1
          %s690 = smul.addr %s689, 8
          %s691 = scalar_lea.vmem [#allocation6], %s690
          %692 = dma.done %s688, 128
        $region64: #{tpu_custom_call.1} parent=51 // pred_fallthru
          _
      $region52: #{tpu_custom_call.1} parent=5 // pred_fallthru
        _
    $region6: #{tpu_custom_call.1} parent=1 // loop_footer
      %s23 = sadd.s32 1, %s19
    $region7: #{tpu_custom_call.1} parent=1 // loop_footer_branch
      %18 = sbr.rel target = $region3
    $region8: #{tpu_custom_call.1} parent=1 // loop_exit
      _
    %693 = vsyncpa [#allocation3], 1
    %s694 = scalar_lea.sflag [#allocation3], 1
    %695 = vsyncpa %s694, 1
    %696 = vsyncpa [#allocation5], 1
    %s697 = scalar_lea.sflag [#allocation5], 1
    %698 = vsyncpa %s697, 1

</llo_original>
